<compile_context>
chip_gen: v5e
topology: v5e:2x2
jax: 0.10.0
libtpu: 0.0.40
codegen_flags: <defaults>
</compile_context>

<pallas_src>
import jax
import jax.numpy as jnp
from jax.experimental import pallas as pl
from jax.experimental.pallas import tpu as pltpu


def _round_up(x, m):
    return ((x + m - 1) // m) * m


# ---------------------------------------------------------------------------
# Fused kernel: DMA row-gather of codebook rows + (clamp(.,-1,1)+1)*0.5
# ---------------------------------------------------------------------------
def _gather_clamp_kernel(ids_ref, emb_hbm, o_ref, copy_sem):
    # ids_ref : (M_pad,)  int32  token ids, scalar-prefetched into SMEM
    # emb_hbm : (TOK, D)  float  codebook, left in HBM (memory_space=pl.ANY)
    # o_ref   : (TM, D)   float  output row tile in VMEM
    # copy_sem: scalar DMA semaphore shared by the TM row copies of this step
    m = pl.program_id(0)
    tm = o_ref.shape[0]
    base = m * tm

    # Issue one row DMA per token id; all TM copies are in flight concurrently.
    @pl.loop(0, tm)
    def _issue(r):
        tok = ids_ref[base + r]
        pltpu.make_async_copy(emb_hbm.at[pl.ds(tok, 1)],     # (1, D) HBM row
                              o_ref.at[pl.ds(r, 1)],         # (1, D) VMEM row
                              copy_sem).start()

    # Wait for all TM copies (identical sizes on the shared semaphore, so the
    # total waited amount equals the total signaled amount).
    @pl.loop(0, tm)
    def _wait(r):
        pltpu.make_async_copy(emb_hbm.at[pl.ds(0, 1)],
                              o_ref.at[pl.ds(r, 1)],
                              copy_sem).wait()

    # Fused epilogue of VQGanVAE.decode: (clamp(img, -1, 1) + 1) * 0.5
    o_ref[...] = ((jnp.clip(o_ref[...], -1.0, 1.0) + 1.0) * 0.5
                  ).astype(o_ref.dtype)


def codebook_gather_clamp(img_seq, embedding):
    """embedding[img_seq] (== one_hot(img_seq).float() @ embedding), then
    (clamp(., -1, 1) + 1) * 0.5, fused into one Pallas kernel.

    img_seq:   (B, N)   integer token ids
    embedding: (TOK, D) float codebook
    returns:   (B, N, D) in embedding.dtype
    """
    B, N = img_seq.shape
    TOK, D = embedding.shape
    M = B * N

    # Row-tile size: multiple of 8 (sublane), and >= 2 tiles whenever possible
    # so the "parallel" M axis can shard across v7x's two TensorCores.
    if M >= 512:
        TM = 256
    elif M >= 16:
        TM = _round_up(_round_up(M, 16) // 2, 8)
    else:
        TM = _round_up(M, 8)
    M_pad = _round_up(M, TM)

    ids = img_seq.reshape(M).astype(jnp.int32)
    # torch.F.one_hot raises on out-of-range ids; here an OOB id would be an
    # OOB DMA, so clamp defensively (documented semantic difference).
    ids = jnp.clip(ids, 0, TOK - 1)
    if M_pad != M:
        ids = jnp.pad(ids, (0, M_pad - M))        # pad rows gather token 0,
                                                  # sliced off below

    out = pl.pallas_call(
        _gather_clamp_kernel,
        out_shape=jax.ShapeDtypeStruct((M_pad, D), embedding.dtype),
        grid_spec=pltpu.PrefetchScalarGridSpec(
            num_scalar_prefetch=1,                # ids -> SMEM
            grid=(M_pad // TM,),
            in_specs=[pl.BlockSpec(memory_space=pl.ANY)],   # codebook in HBM
            out_specs=pl.BlockSpec((TM, D), lambda m, ids: (m, 0)),
            scratch_shapes=[pltpu.SemaphoreType.DMA(())],
        ),
        compiler_params=pltpu.CompilerParams(
            dimension_semantics=("parallel",)),
    )(ids, embedding)

    return out[:M].reshape(B, N, D)


# ---------------------------------------------------------------------------
# Wrapper mirroring VQGanVAE.decode semantics
# ---------------------------------------------------------------------------
def vqgan_vae_decode(img_seq, embedding, *, channels_last=True):
    B, N = img_seq.shape
    H = W = int(round(N ** 0.5))
    assert H * W == N

    # z = one_hot(img_seq).float() @ embedding, with the clamp/rescale fused
    # into the kernel (elementwise clamp commutes with the layout rearrange,
    # and the external decoder between them is an identity placeholder here).
    img = codebook_gather_clamp(img_seq, embedding)          # (B, N, D)

    # TODO(synk): self.model.decode(z) — external VQGAN decoder (checkpoint)
    # not reproduced; identity placeholder.

    img = img.reshape(B, H, W, -1)                           # NHWC, lane-dense
    if channels_last:
        return img
    # Strict torch parity layout 'b c h w' (costs an extra HBM round trip and
    # lane-hostile stores; only do it if the consumer truly needs NCHW).
    return jnp.transpose(img, (0, 3, 1, 2))


# ---------------------------------------------------------------------------
if __name__ == "__main__":
    key = jax.random.PRNGKey(0)
    k_idx, k_emb = jax.random.split(key)

    B = 2            # batch
    N = 16           # sequence of codebook tokens (h = w = 4)
    NUM_TOKENS = 256
    EMBED_DIM = 128

    img_seq = jax.random.randint(k_idx, (B, N), 0, NUM_TOKENS, dtype=jnp.int32)
    embedding = jax.random.normal(k_emb, (NUM_TOKENS, EMBED_DIM),
                                  dtype=jnp.float32)

    out = vqgan_vae_decode(img_seq, embedding)               # (B, H, W, D)
    out = jax.block_until_ready(out)

    # pure-JAX reference with the original PyTorch op order
    one_hot = jax.nn.one_hot(img_seq, NUM_TOKENS, dtype=jnp.float32)
    z_ref = jnp.matmul(one_hot, embedding,
                       precision=jax.lax.Precision.HIGHEST)  # (B, N, D)
    H = W = int(round(N ** 0.5))
    z_ref = jnp.transpose(z_ref.reshape(B, H, W, EMBED_DIM), (0, 3, 1, 2))
    img_ref_nchw = (jnp.clip(z_ref, -1.0, 1.0) + 1.0) * 0.5  # (B, D, H, W)

    assert out.shape == (B, H, W, EMBED_DIM)
    assert jnp.allclose(jnp.transpose(out, (0, 3, 1, 2)), img_ref_nchw,
                        atol=1e-5, rtol=1e-5)

    # optional strict-NCHW path
    out_nchw = jax.block_until_ready(
        vqgan_vae_decode(img_seq, embedding, channels_last=False))
    assert out_nchw.shape == (B, EMBED_DIM, H, W)
    assert jnp.allclose(out_nchw, img_ref_nchw, atol=1e-5, rtol=1e-5)

    print("KERNEL_OK")
</pallas_src>

<mosaic_0001>
module attributes {stable_mosaic.version = 11 : i64} {
  func.func @_gather_clamp_kernel(%arg0: i32, %arg1: memref<32xi32, #tpu.memory_space<smem>>, %arg2: memref<256x128xf32, #tpu.memory_space<any>>, %arg3: memref<16x128xf32, #tpu.memory_space<vmem>>, %arg4: memref<!tpu.dma_semaphore, #tpu.memory_space<semaphore_mem>>) attributes {dimension_semantics = [#tpu.dimension_semantics<parallel>], iteration_bounds = array<i64: 2>, scalar_prefetch = 1 : i64, scratch_operands = 1 : i64, tpu.core_type = #tpu.core_type<tc>, window_params = [{}, {transform_indices = @transform_1, window_bounds = array<i64: 16, 128>}]} {
    %c16_i32 = arith.constant 16 : i32
    %0 = arith.muli %arg0, %c16_i32 : i32
    %c0_i32 = arith.constant 0 : i32
    %c16_i32_0 = arith.constant 16 : i32
    %1 = arith.addi %c0_i32, %c16_i32_0 : i32
    %c1_i32 = arith.constant 1 : i32
    scf.for %arg5 = %c0_i32 to %1 step %c1_i32  : i32 {
      %c1_i32_12 = arith.constant 1 : i32
      %13 = arith.muli %arg5, %c1_i32_12 : i32
      %c0_i32_13 = arith.constant 0 : i32
      %14 = arith.addi %c0_i32_13, %13 : i32
      %15 = arith.addi %0, %14 : i32
      %16 = arith.index_cast %15 : i32 to index
      %17 = memref.load %arg1[%16] : memref<32xi32, #tpu.memory_space<smem>>
      %c0_i32_14 = arith.constant 0 : i32
      %18 = tpu.memref_slice %arg2[%17, %c0_i32_14] : memref<256x128xf32, #tpu.memory_space<any>> -> memref<1x128xf32, #tpu.memory_space<any>>
      %c0_i32_15 = arith.constant 0 : i32
      %19 = tpu.memref_slice %arg3[%14, %c0_i32_15] : memref<16x128xf32, #tpu.memory_space<vmem>> -> memref<1x128xf32, #tpu.memory_space<vmem>>
      tpu.enqueue_dma source(%18 : memref<1x128xf32, #tpu.memory_space<any>>) target(%19 : memref<1x128xf32, #tpu.memory_space<vmem>>) target_semaphore(%arg4 : memref<!tpu.dma_semaphore, #tpu.memory_space<semaphore_mem>>)
    }
    %c16_i32_1 = arith.constant 16 : i32
    %c0_i32_2 = arith.constant 0 : i32
    %c16_i32_3 = arith.constant 16 : i32
    %2 = arith.addi %c0_i32_2, %c16_i32_3 : i32
    %c1_i32_4 = arith.constant 1 : i32
    scf.for %arg5 = %c0_i32_2 to %2 step %c1_i32_4  : i32 {
      %c1_i32_12 = arith.constant 1 : i32
      %13 = arith.muli %arg5, %c1_i32_12 : i32
      %c0_i32_13 = arith.constant 0 : i32
      %14 = arith.addi %c0_i32_13, %13 : i32
      %c0_i32_14 = arith.constant 0 : i32
      %c0_i32_15 = arith.constant 0 : i32
      %15 = tpu.memref_slice %arg2[%c0_i32_14, %c0_i32_15] : memref<256x128xf32, #tpu.memory_space<any>> -> memref<1x128xf32, #tpu.memory_space<any>>
      %c0_i32_16 = arith.constant 0 : i32
      %16 = tpu.memref_slice %arg3[%14, %c0_i32_16] : memref<16x128xf32, #tpu.memory_space<vmem>> -> memref<1x128xf32, #tpu.memory_space<vmem>>
      tpu.wait_dma2 semaphore(%arg4 : memref<!tpu.dma_semaphore, #tpu.memory_space<semaphore_mem>>) src(%15 : memref<1x128xf32, #tpu.memory_space<any>>) dst(%16 : memref<1x128xf32, #tpu.memory_space<vmem>>)
    }
    %c16_i32_5 = arith.constant 16 : i32
    %c0 = arith.constant 0 : index
    %c0_6 = arith.constant 0 : index
    %3 = vector.load %arg3[%c0, %c0_6] : memref<16x128xf32, #tpu.memory_space<vmem>>, vector<16x128xf32>
    %cst = arith.constant -1.000000e+00 : f32
    %cst_7 = arith.constant 1.000000e+00 : f32
    %4 = vector.broadcast %cst : f32 to vector<16x128xf32>
    %5 = arith.maximumf %4, %3 : vector<16x128xf32>
    %6 = vector.broadcast %cst_7 : f32 to vector<16x128xf32>
    %7 = arith.minimumf %6, %5 : vector<16x128xf32>
    %cst_8 = arith.constant 1.000000e+00 : f32
    %8 = vector.broadcast %cst_8 : f32 to vector<16x128xf32>
    %9 = arith.addf %7, %8 : vector<16x128xf32>
    %cst_9 = arith.constant 5.000000e-01 : f32
    %10 = vector.broadcast %cst_9 : f32 to vector<16x128xf32>
    %11 = arith.mulf %9, %10 : vector<16x128xf32>
    %c0_10 = arith.constant 0 : index
    %c0_11 = arith.constant 0 : index
    %12 = vector.load %arg3[%c0_10, %c0_11] : memref<16x128xf32, #tpu.memory_space<vmem>>, vector<16x128xf32>
    tpu.vector_store %arg3[%c0_10, %c0_11], %11 {strides = array<i32>} : memref<16x128xf32, #tpu.memory_space<vmem>>, vector<16x128xf32>,
    return
  }
  func.func @transform_1(%arg0: i32, %arg1: memref<32xi32, #tpu.memory_space<smem>>) -> (i32, i32) {
    %c0_i32 = arith.constant 0 : i32
    %c0_i32_0 = arith.constant 0 : i32
    return %arg0, %c0_i32 : i32, i32
  }
}

</mosaic_0001>

<llo_original>
// kernel: tpu_custom_call.1
$region0: #{tpu_custom_call.1}
  #allocation0 [shape = 'u32[]', space=smem, size = 0x4, offset = 0x4, fixed_abs, tag = 'smem constant byte address 0x4 - core index']
  #allocation1 [shape = 'u32[72,128]{1,0:T(1,128)}', space=vmem, size = 0x9000, scoped, tag = 'internal scratch']
  #allocation2 [shape = 's32[1]{0}', space=sflag, size = 0x4, scoped, tag = 'scratch operand']
  #allocation3 [shape = 's32[1]{0}', space=sflag, size = 0x4, scoped, tag = 'scoped memory for tpu_custom_call.1']
  #allocation4 [shape = 'u8[512]{0}', space=smem, size = 0x200, scoped, tag = 'prefetched SMEM operand 0']
  #allocation7 [shape = 's32[]', space=sflag, size = 0x4, offset = 0, fixed_abs, tag = 'sflag constant byte address 0x0 - dummy sync flag']
  #allocation8 [shape = 's32[]', space=sflag, size = 0x4, offset = 0, fixed_abs, tag = 'sflag constant byte address 0x0 - dummy sync flag']
  #allocation9 [shape = 'u32[]', space=smem, size = 0x4, offset = 0x44, fixed_abs, tag = 'smem constant byte address 0x44 - assertion arg 0']
  #allocation10 [shape = 'u32[]', space=smem, size = 0x4, offset = 0x48, fixed_abs, tag = 'smem constant byte address 0x48 - assertion arg 1']
  %s0 = inlined_call_operand.hbm [shape: s32[32], index: 0, kind: input, shape index: {}]
  %s1 = inlined_call_operand.hbm [shape: f32[256,128], index: 1, kind: input, shape index: {}]
  %s2 = inlined_call_operand.hbm [shape: f32[32,128], index: 2, kind: output, shape index: {}]
  %s3 = sld [smem:[#allocation0]]
  $region43: #{tpu_custom_call.1} parent=0
    _
  %s5 = ssub.s32 1, %s3
  %s6 = scalar_select 0, %s5, %s3
  %s8 = sshll.u32 %s0, 4
  %s9 = int_to_ptr.hbm [resolvable:$true] %s8
  %11 = dma.hbm_to_smem %s9, 16, [#allocation4], [#allocation3]
  %13 = dma.done [#allocation3], 16
  %14 = sfence
  $region1: #{tpu_custom_call.1} parent=0
    #allocation5 [shape = 'u8[16384]{0}', space=vmem, size = 0x4000, scoped, tag = 'output window, operand 0']
    #allocation6 [shape = 's32[2]{0}', space=sflag, size = 0x8, scoped, tag = 'scoped memory for tpu_custom_call.1']
    %15 = vsyncpa [#allocation6], 0
    %s16 = scalar_lea.sflag [#allocation6], 1
    %17 = vsyncpa %s16, 0
    loop: start=0, step=1, limit=3
    $region2: #{tpu_custom_call.1} parent=1 // loop_pre_header
      _
    $region3: #{tpu_custom_call.1} parent=1 // loop_header
      %s19 = sphi 0, %s23
      %p20 = scmp.ge.s32.totalorder %s19, 3
      %s28 = sphi 0, %s30
      %s31 = sphi 0, %s28
      %s41 = sphi 0, %s31
    $region4: #{tpu_custom_call.1} parent=1 // loop_header_branch
      %22 = sbr.rel (%p20) target = $region8
    $region5: #{tpu_custom_call.1} parent=1 // loop_body
      %s24 = ssub.s32 %s19, 1
      %s25 = sadd.s32 %s19, 1
      %s26 = ssub.s32 %s19, %s25
      %p27 = scmp.eq.s32.totalorder %s26, 0
      %s29 = sadd.s32 %s28, 1
      %s30 = scalar_select %p27, %s28, %s29
      %p32 = pneg %p27
      %p33 = scmp.eq.s32.totalorder %s19, 1
      %p34 = por %p32, %p33
      %p35 = scmp.ne.s32.totalorder %s28, %s31
      %p36 = scmp.eq.s32.totalorder %s19, 0
      %p37 = por %p35, %p36
      %p38 = scmp.ne.s32.totalorder %s28, %s31
      %p39 = scmp.eq.s32.totalorder %s24, 1
      %p40 = por %p38, %p39
      %p42 = scmp.ne.s32.totalorder %s31, %s41
      %p43 = scmp.eq.s32.totalorder %s24, 0
      %p44 = por %p42, %p43
      %p45 = scmp.lt.s32.totalorder %s19, 2
      // Predicated region
      $region9: #{tpu_custom_call.1} parent=5 // pred_check
        %p46 = pneg %p45
      $region10: #{tpu_custom_call.1} parent=5 // pred_check_branch
        %48 = sbr.rel (%p46) target = $region12
      $region11: #{tpu_custom_call.1} parent=5 // pred_region
        %p49 = pneg %p37
        %p50 = pneg %p34
        %s51 = sand.u32 %s28, 1
        %s52 = scalar_lea.sflag [#allocation6], %s51
        %s53 = sand.u32 %s28, 1
        %s54 = smul.addr %s53, 16
        %s55 = scalar_lea.vmem [#allocation5], %s54
        %s56 = smul.u32 2, %s19
        %s57 = smul.u32 %s19, 16
        loop: start=0, step=1, limit=16
        $region13: #{tpu_custom_call.1} parent=11 // loop_pre_header
          _
        $region14: #{tpu_custom_call.1} parent=11 // loop_header
          %s59 = sphi 0, %s63
          %p60 = scmp.ge.s32.totalorder %s59, 16
        $region15: #{tpu_custom_call.1} parent=11 // loop_header_branch
          %62 = sbr.rel (%p60) target = $region19
        $region16: #{tpu_custom_call.1} parent=11 // loop_body
          %s64 = sadd.s32 %s57, %s59
          %s65 = sld [smem:[#allocation4 + %s64]]
          %s66 = scalar_lea.hbm %s1, %s65
          %s67 = scalar_lea.vmem %s55, %s59 [#allocation5]
          // Predicated region
          $region20: #{tpu_custom_call.1} parent=16 // pred_check
            _
          $region21: #{tpu_custom_call.1} parent=16 // pred_check_branch
            %69 = sbr.rel target = $region23
          $region22: #{tpu_custom_call.1} parent=16 // pred_region
            %70 = sst [smem:[#allocation9]] [#allocation8]
            %71 = sst [smem:[#allocation10]] [#allocation7]
          $region23: #{tpu_custom_call.1} parent=16 // pred_fallthru
            _
          %73 = shalt.err (0)
          %s75 = sshll.u32 %s66, 4
          %s76 = int_to_ptr.hbm [resolvable:$true] %s75
          %s77 = sshll.u32 %s67, 4
          %s78 = int_to_ptr.vmem [resolvable:$true] %s77
          %80 = dma.hbm_to_vmem [thread:$0]  %s76, 16, %s78, [#allocation2]
        $region17: #{tpu_custom_call.1} parent=11 // loop_footer
          %s63 = sadd.s32 1, %s59
        $region18: #{tpu_custom_call.1} parent=11 // loop_footer_branch
          %58 = sbr.rel target = $region14
        $region19: #{tpu_custom_call.1} parent=11 // loop_exit
          _
        loop: start=0, step=1, limit=16
        $region24: #{tpu_custom_call.1} parent=11 // loop_pre_header
          _
        $region25: #{tpu_custom_call.1} parent=11 // loop_header
          %s82 = sphi 0, %s86
          %p83 = scmp.ge.s32.totalorder %s82, 16
        $region26: #{tpu_custom_call.1} parent=11 // loop_header_branch
          %85 = sbr.rel (%p83) target = $region30
        $region27: #{tpu_custom_call.1} parent=11 // loop_body
          %s87 = smul.u32 1, 1
          %s88 = sshll.u32 %s87, 4
          %89 = dma.done [#allocation2], %s88
        $region28: #{tpu_custom_call.1} parent=11 // loop_footer
          %s86 = sadd.s32 1, %s82
        $region29: #{tpu_custom_call.1} parent=11 // loop_footer_branch
          %81 = sbr.rel target = $region25
        $region30: #{tpu_custom_call.1} parent=11 // loop_exit
          _
        %v90 = vld [vmem:[%s55] sm:$0xff]
        %v91 = vld [vmem:[%s55 + $0x8] sm:$0xff]
        %v92 = vmax.f32 %v90, -1.0
        %v93 = vmax.f32 %v91, -1.0
        %v94 = vmin.f32 %v92, 1.0
        %v95 = vmin.f32 %v93, 1.0
        %v96 = vadd.f32 %v94, 1.0
        %v97 = vadd.f32 %v95, 1.0
        %v98 = vmul.f32 %v96, 0.5
        %v99 = vmul.f32 %v97, 0.5
        %100 = vst [vmem:[%s55] sm:$0xff] %v98
        %101 = vst [vmem:[%s55 + $0x8] sm:$0xff] %v99
        %s102 = sand.u32 %s28, 1
        %s103 = scalar_lea.sflag [#allocation6], %s102
        %s104 = sand.u32 %s28, 1
        %s105 = smul.addr %s104, 16
        %s106 = scalar_lea.vmem [#allocation5], %s105
        // Predicated region
        $region31: #{tpu_custom_call.1} parent=11 // pred_check
          %p107 = pneg %p34
        $region32: #{tpu_custom_call.1} parent=11 // pred_check_branch
          %109 = sbr.rel (%p107) target = $region34
        $region33: #{tpu_custom_call.1} parent=11 // pred_region
          %s110 = smul.u32 2, %s19
          %112 = vsyncadd %s103, 0
          %s113 = smul.addr %s110, 8
          %s114 = scalar_lea.hbm %s2, %s113
          %s115 = sshll.u32 %s106, 4
          %s116 = int_to_ptr.vmem [resolvable:$true] %s115
          %s117 = sshll.u32 %s114, 4
          %s118 = int_to_ptr.hbm [resolvable:$true] %s117
          %123 = dma.vmem_to_hbm [thread:$0]  %s116, 256, %s118, %s103, 128, 128, 8
        $region34: #{tpu_custom_call.1} parent=11 // pred_fallthru
          _
      $region12: #{tpu_custom_call.1} parent=5 // pred_fallthru
        _
      %p124 = scmp.le.s32.totalorder 1, %s19
      // Predicated region
      $region35: #{tpu_custom_call.1} parent=5 // pred_check
        %p125 = pneg %p124
      $region36: #{tpu_custom_call.1} parent=5 // pred_check_branch
        %127 = sbr.rel (%p125) target = $region38
      $region37: #{tpu_custom_call.1} parent=5 // pred_region
        %s128 = ssub.s32 %s19, 1
        // Predicated region
        $region39: #{tpu_custom_call.1} parent=37 // pred_check
          %p129 = pneg %p40
        $region40: #{tpu_custom_call.1} parent=37 // pred_check_branch
          %131 = sbr.rel (%p129) target = $region42
        $region41: #{tpu_custom_call.1} parent=37 // pred_region
          %s132 = sand.u32 %s31, 1
          %s133 = scalar_lea.sflag [#allocation6], %s132
          %s134 = sand.u32 %s31, 1
          %s135 = smul.addr %s134, 16
          %s136 = scalar_lea.vmem [#allocation5], %s135
          %138 = dma.done %s133, 256
        $region42: #{tpu_custom_call.1} parent=37 // pred_fallthru
          _
      $region38: #{tpu_custom_call.1} parent=5 // pred_fallthru
        _
    $region6: #{tpu_custom_call.1} parent=1 // loop_footer
      %s23 = sadd.s32 1, %s19
    $region7: #{tpu_custom_call.1} parent=1 // loop_footer_branch
      %18 = sbr.rel target = $region3
    $region8: #{tpu_custom_call.1} parent=1 // loop_exit
      _
    %139 = vsyncpa [#allocation6], 1
    %s140 = scalar_lea.sflag [#allocation6], 1
    %141 = vsyncpa %s140, 1
  %142 = vsyncmov [#allocation2]
  %s143 = vpop.sfrf %142
  %p144 = scmp.eq.s32.totalorder %s143, 0
  %p145 = pneg %p144
  %147 = shalt.err (%p145)

</llo_original>
